<compile_context>
chip_gen: v5e
topology: v5e:2x2
jax: 0.10.0
libtpu: 0.0.40
codegen_flags: <defaults>
</compile_context>

<pallas_src>
import jax
import jax.numpy as jnp
from jax.experimental import pallas as pl
from jax.experimental.pallas import tpu as pltpu


_LANE_WIDTHS = (1024, 512, 256, 128)       # lane-dense last-dim candidates
_MIN_KERNEL_ELEMS = 128 * 1024             # below this, plain XLA round wins
_DEFAULT_VMEM_CAP = 128 * 1024 * 1024      # fallback physical VMEM (v5e/v6e)
_MAX_SCOPED_VMEM = 48 * 1024 * 1024        # never ask for more scoped VMEM
_MIN_SCOPED_VMEM = 32 * 1024 * 1024


def _ste_round_kernel(x_ref, o_ref):
    # Elementwise round-half-to-even on the current VMEM tile (VPU work).
    o_ref[...] = jnp.round(x_ref[...])


def _vmem_limit_bytes():
    """Generation-aware scoped-VMEM budget (v7x has 64 MiB/TC vs 128 MiB)."""
    try:
        cap = int(pltpu.get_tpu_info().vmem_capacity_bytes)
    except Exception:
        cap = _DEFAULT_VMEM_CAP
    return max(_MIN_SCOPED_VMEM, min(cap * 3 // 4, _MAX_SCOPED_VMEM))


def _sublane_multiple(dtype):
    """Row-tile alignment so packed dtypes fill whole vregs (8/16/32 rows)."""
    itemsize = jnp.dtype(dtype).itemsize
    if itemsize >= 4:
        return 8
    if itemsize == 2:
        return 16
    return 32


def _round_up(n, m):
    return ((n + m - 1) // m) * m


def _round_forward(x, *, donate=False):
    """Forward pass: x.round(), lane-dense Pallas kernel with XLA fallback."""
    total = int(x.size)
    if x.ndim == 0 or total == 0 or total < _MIN_KERNEL_ELEMS:
        # Launch + pipeline-prologue overhead would dominate; XLA's fused
        # elementwise round is already at HBM roofline for small inputs.
        return jnp.round(x)

    lanes = None
    for cand in _LANE_WIDTHS:
        if total % cand == 0:
            lanes = cand
            break
    if lanes is None:
        # TODO(synk): sizes not divisible by 128 fall back to XLA round rather
        # than paying an extra pad+slice HBM pass around the kernel.
        return jnp.round(x)

    rows = total // lanes
    x2d = x.reshape(rows, lanes)        # contiguous reshape: no data movement

    sub = _sublane_multiple(x.dtype)
    itemsize = jnp.dtype(x.dtype).itemsize
    bytes_per_row = lanes * itemsize

    vmem_limit = _vmem_limit_bytes()
    # in + out, each double-buffered => ~4 blocks live; keep some headroom.
    target_block_bytes = vmem_limit // 6
    max_tile_rows = max(sub, ((target_block_bytes // bytes_per_row) // sub) * sub)

    if rows <= max_tile_rows:
        # Whole array fits in one block. Split into 2 balanced programs so a
        # 2-TensorCore chip (v7x) shards the bandwidth-bound work; the extra
        # ~0.35 us grid step is negligible on 1-TC chips.
        if rows >= 2 * sub:
            tile_rows = _round_up((rows + 1) // 2, sub)
        else:
            tile_rows = rows
    else:
        # Multiple programs: pick an even program count (balanced across the
        # two v7x TensorCores) and equalize block sizes to avoid a tiny ragged
        # trailing block.
        n_prog = pl.cdiv(rows, max_tile_rows)
        if n_prog % 2 == 1:
            n_prog += 1
        tile_rows = min(max_tile_rows, _round_up(pl.cdiv(rows, n_prog), sub))

    grid = (pl.cdiv(rows, tile_rows),)   # ragged last block is masked by Pallas

    out2d = pl.pallas_call(
        _ste_round_kernel,
        out_shape=jax.ShapeDtypeStruct((rows, lanes), x.dtype),
        grid_spec=pltpu.PrefetchScalarGridSpec(
            num_scalar_prefetch=0,
            grid=grid,
            in_specs=[pl.BlockSpec((tile_rows, lanes), lambda i: (i, 0))],
            out_specs=pl.BlockSpec((tile_rows, lanes), lambda i: (i, 0)),
        ),
        compiler_params=pltpu.CompilerParams(
            dimension_semantics=("parallel",),
            vmem_limit_bytes=vmem_limit,
        ),
        # Callers that can donate x avoid a separate HBM output allocation.
        input_output_aliases=({0: 0} if donate else {}),
    )(x2d)

    return out2d.reshape(x.shape)


@jax.custom_vjp
def ste_layer(x):
    """Pallas implementation of STELayer: forward = round, grad = identity."""
    return _round_forward(x)


def _ste_fwd(x):
    return _round_forward(x), None


def _ste_bwd(_, g):
    return (g,)   # straight-through (identity) gradient


ste_layer.defvjp(_ste_fwd, _ste_bwd)


if __name__ == "__main__":
    key = jax.random.PRNGKey(0)
    k1, k2, k3, k4 = jax.random.split(key, 4)

    # 1) Small NCHW input matching the module's typical usage (2048 elems):
    #    below _MIN_KERNEL_ELEMS -> XLA fallback path, identical semantics.
    x1 = jax.random.normal(k1, (2, 4, 16, 16), dtype=jnp.float32) * 3.0
    y1 = jax.block_until_ready(ste_layer(x1))
    assert y1.shape == x1.shape and y1.dtype == x1.dtype
    assert bool(jnp.all(y1 == jnp.round(x1)))

    # 2) Larger f32 input exercising the Pallas path with a 2-program
    #    balanced grid (600 rows x 1024 lanes -> tile_rows=304, grid=(2,)).
    x2 = jax.random.normal(k2, (6, 25, 64, 64), dtype=jnp.float32) * 3.0
    y2 = jax.block_until_ready(ste_layer(x2))
    assert bool(jnp.all(y2 == jnp.round(x2)))

    # 3) bf16 input: dtype-aware sublane alignment (tile rows multiple of 16).
    x3 = (jax.random.normal(k3, (4, 8, 128, 128), dtype=jnp.float32) * 3.0
          ).astype(jnp.bfloat16)
    y3 = jax.block_until_ready(ste_layer(x3))
    assert y3.dtype == jnp.bfloat16
    assert bool(jnp.all(y3 == jnp.round(x3)))

    # 4) Size not divisible by 128 -> XLA fallback path, same semantics.
    x4 = jax.random.normal(k4, (2, 3, 5, 7), dtype=jnp.float32) * 3.0
    y4 = jax.block_until_ready(ste_layer(x4))
    assert bool(jnp.all(y4 == jnp.round(x4)))

    # 5) Straight-through gradient: d/dx sum(ste(x)) == ones (not zeros),
    #    checked on both the fallback and kernel paths.
    g1 = jax.block_until_ready(jax.grad(lambda v: jnp.sum(ste_layer(v)))(x1))
    assert bool(jnp.all(g1 == jnp.ones_like(x1)))
    g2 = jax.block_until_ready(jax.grad(lambda v: jnp.sum(ste_layer(v)))(x2))
    assert bool(jnp.all(g2 == jnp.ones_like(x2)))

    print("KERNEL_OK")
</pallas_src>

<mosaic_0001>
module attributes {stable_mosaic.version = 11 : i64} {
  func.func @_ste_round_kernel(%arg0: i32, %arg1: memref<304x1024xf32, #tpu.memory_space<vmem>>, %arg2: memref<304x1024xf32, #tpu.memory_space<vmem>>) attributes {dimension_semantics = [#tpu.dimension_semantics<parallel>], iteration_bounds = array<i64: 2>, scalar_prefetch = 0 : i64, scratch_operands = 0 : i64, tpu.core_type = #tpu.core_type<tc>, window_params = [{transform_indices = @transform_0, window_bounds = array<i64: 304, 1024>}, {transform_indices = @transform_1, window_bounds = array<i64: 304, 1024>}]} {
    %c0 = arith.constant 0 : index
    %c0_0 = arith.constant 0 : index
    %0 = vector.load %arg1[%c0, %c0_0] : memref<304x1024xf32, #tpu.memory_space<vmem>>, vector<304x1024xf32>
    %1 = math.roundeven %0 : vector<304x1024xf32>
    %c0_1 = arith.constant 0 : index
    %c0_2 = arith.constant 0 : index
    %2 = vector.load %arg2[%c0_1, %c0_2] : memref<304x1024xf32, #tpu.memory_space<vmem>>, vector<304x1024xf32>
    tpu.vector_store %arg2[%c0_1, %c0_2], %1 {strides = array<i32>} : memref<304x1024xf32, #tpu.memory_space<vmem>>, vector<304x1024xf32>,
    return
  }
  func.func @transform_0(%arg0: i32) -> (i32, i32) {
    %c0_i32 = arith.constant 0 : i32
    %c0_i32_0 = arith.constant 0 : i32
    return %arg0, %c0_i32 : i32, i32
  }
  func.func @transform_1(%arg0: i32) -> (i32, i32) {
    %c0_i32 = arith.constant 0 : i32
    %c0_i32_0 = arith.constant 0 : i32
    return %arg0, %c0_i32 : i32, i32
  }
}

</mosaic_0001>

<llo_original>
// kernel: tpu_custom_call.1
$region0: #{tpu_custom_call.1}
  #allocation0 [shape = 'u32[]', space=smem, size = 0x4, offset = 0x4, fixed_abs, tag = 'smem constant byte address 0x4 - core index']
  #allocation1 [shape = 'u32[72,128]{1,0:T(1,128)}', space=vmem, size = 0x9000, scoped, tag = 'internal scratch']
  %s0 = inlined_call_operand.hbm [shape: f32[600,1024], index: 0, kind: input, shape index: {}]
  %s1 = inlined_call_operand.hbm [shape: f32[600,1024], index: 1, kind: output, shape index: {}]
  %s2 = sld [smem:[#allocation0]]
  $region41: #{tpu_custom_call.1} parent=0
    _
  %s4 = ssub.s32 1, %s2
  %s5 = scalar_select 0, %s4, %s2
  $region1: #{tpu_custom_call.1} parent=0
    #allocation2 [shape = 'u8[2490368]{0}', space=vmem, size = 0x260000, scoped, tag = 'input window, operand 0']
    #allocation3 [shape = 's32[2]{0}', space=sflag, size = 0x8, scoped, tag = 'scoped memory for tpu_custom_call.1']
    #allocation4 [shape = 's32[2]{0}', space=sflag, size = 0x8, scoped, tag = 'scoped memory for tpu_custom_call.1']
    #allocation5 [shape = 'u8[2490368]{0}', space=vmem, size = 0x260000, scoped, tag = 'output window, operand 0']
    %6 = vsyncpa [#allocation3], 0
    %s7 = scalar_lea.sflag [#allocation3], 1
    %8 = vsyncpa %s7, 0
    %9 = vsyncpa [#allocation4], 0
    %s10 = scalar_lea.sflag [#allocation4], 1
    %11 = vsyncpa %s10, 0
    loop: start=0, step=1, limit=4
    $region2: #{tpu_custom_call.1} parent=1 // loop_pre_header
      _
    $region3: #{tpu_custom_call.1} parent=1 // loop_header
      %s13 = sphi 0, %s17
      %p14 = scmp.ge.s32.totalorder %s13, 4
      %s23 = sphi 0, %s25
      %s26 = sphi 0, %s23
      %s27 = sphi 0, %s26
      %s43 = sphi 0, %s27
      %s49 = sphi 0, %s51
      %s52 = sphi 0, %s49
      %s53 = sphi 0, %s52
      %s69 = sphi 0, %s53
    $region4: #{tpu_custom_call.1} parent=1 // loop_header_branch
      %16 = sbr.rel (%p14) target = $region8
    $region5: #{tpu_custom_call.1} parent=1 // loop_body
      %s18 = ssub.s32 %s13, 1
      %s19 = ssub.s32 %s13, 2
      %s20 = sadd.s32 %s13, 1
      %s21 = ssub.s32 %s13, %s20
      %p22 = scmp.eq.s32.totalorder %s21, 0
      %s24 = sadd.s32 %s23, 1
      %s25 = scalar_select %p22, %s23, %s24
      %p28 = pneg %p22
      %p29 = scmp.eq.s32.totalorder %s13, 1
      %p30 = por %p28, %p29
      %p31 = scmp.ne.s32.totalorder %s23, %s26
      %p32 = scmp.eq.s32.totalorder %s13, 0
      %p33 = por %p31, %p32
      %p34 = scmp.ne.s32.totalorder %s23, %s26
      %p35 = scmp.eq.s32.totalorder %s18, 1
      %p36 = por %p34, %p35
      %p37 = scmp.ne.s32.totalorder %s26, %s27
      %p38 = scmp.eq.s32.totalorder %s18, 0
      %p39 = por %p37, %p38
      %p40 = scmp.ne.s32.totalorder %s26, %s27
      %p41 = scmp.eq.s32.totalorder %s19, 1
      %p42 = por %p40, %p41
      %p44 = scmp.ne.s32.totalorder %s27, %s43
      %p45 = scmp.eq.s32.totalorder %s19, 0
      %p46 = por %p44, %p45
      %s47 = ssub.s32 %s13, %s20
      %p48 = scmp.eq.s32.totalorder %s47, 0
      %s50 = sadd.s32 %s49, 1
      %s51 = scalar_select %p48, %s49, %s50
      %p54 = pneg %p48
      %p55 = scmp.eq.s32.totalorder %s13, 1
      %p56 = por %p54, %p55
      %p57 = scmp.ne.s32.totalorder %s49, %s52
      %p58 = scmp.eq.s32.totalorder %s13, 0
      %p59 = por %p57, %p58
      %p60 = scmp.ne.s32.totalorder %s49, %s52
      %p61 = scmp.eq.s32.totalorder %s18, 1
      %p62 = por %p60, %p61
      %p63 = scmp.ne.s32.totalorder %s52, %s53
      %p64 = scmp.eq.s32.totalorder %s18, 0
      %p65 = por %p63, %p64
      %p66 = scmp.ne.s32.totalorder %s52, %s53
      %p67 = scmp.eq.s32.totalorder %s19, 1
      %p68 = por %p66, %p67
      %p70 = scmp.ne.s32.totalorder %s53, %s69
      %p71 = scmp.eq.s32.totalorder %s19, 0
      %p72 = por %p70, %p71
      %p73 = scmp.le.s32.totalorder 1, %s13
      %p74 = scmp.lt.s32.totalorder %s13, 3
      %p75 = pnand %p73, %p74
      %p76 = pneg %p75
      // Predicated region
      $region9: #{tpu_custom_call.1} parent=5 // pred_check
        _
      $region10: #{tpu_custom_call.1} parent=5 // pred_check_branch
        %78 = sbr.rel (%p75) target = $region12
      $region11: #{tpu_custom_call.1} parent=5 // pred_region
        %s79 = ssub.s32 %s13, 1
      $region12: #{tpu_custom_call.1} parent=5 // pred_fallthru
        _
      %p80 = scmp.lt.s32.totalorder %s13, 2
      // Predicated region
      $region13: #{tpu_custom_call.1} parent=5 // pred_check
        %p81 = pneg %p80
      $region14: #{tpu_custom_call.1} parent=5 // pred_check_branch
        %83 = sbr.rel (%p81) target = $region16
      $region15: #{tpu_custom_call.1} parent=5 // pred_region
        // Predicated region
        $region17: #{tpu_custom_call.1} parent=15 // pred_check
          %p84 = pneg %p33
        $region18: #{tpu_custom_call.1} parent=15 // pred_check_branch
          %86 = sbr.rel (%p84) target = $region20
        $region19: #{tpu_custom_call.1} parent=15 // pred_region
          %s87 = sand.u32 %s23, 1
          %s88 = scalar_lea.sflag [#allocation3], %s87
          %s89 = sand.u32 %s23, 1
          %s90 = smul.addr %s89, 2432
          %s91 = scalar_lea.vmem [#allocation2], %s90
          %s92 = smul.u32 38, %s13
          %s93 = ssub.s32 75, %s92
          %p94 = scmp.lt.s32.totalorder %s93, 38
          %s95 = scalar_select %p94, %s93, 38
          %s96 = smul.u32 8, %s95
          %s97 = smul.u32 %s96, 8
          %s98 = ssub.s32 2432, %s97
          %s99 = sshll.u32 %s98, 4
          %100 = vsyncadd %s88, %s99
          %p101 = scmp.ne.s32.totalorder 0, %s97
          %s102 = smul.addr %s92, 8
          %s103 = smul.addr %s102, 8
          %s104 = scalar_lea.hbm %s0, %s103
          %s105 = smul.u32 64, %s95
          %s106 = sshll.u32 %s104, 4
          %s107 = int_to_ptr.hbm [resolvable:$true] %s106
          %s108 = sshll.u32 %s91, 4
          %s109 = int_to_ptr.vmem [resolvable:$true] %s108
          %s110 = sshll.u32 %s105, 4
          %114 = dma.hbm_to_vmem [thread:$0]  (%p101), %s107, %s110, %s109, %s88, 1024, 1024, 64
        $region20: #{tpu_custom_call.1} parent=15 // pred_fallthru
          _
      $region16: #{tpu_custom_call.1} parent=5 // pred_fallthru
        _
      %p115 = scmp.le.s32.totalorder 1, %s13
      %p116 = scmp.lt.s32.totalorder %s13, 3
      %p117 = pnand %p115, %p116
      %p118 = pneg %p117
      // Predicated region
      $region21: #{tpu_custom_call.1} parent=5 // pred_check
        _
      $region22: #{tpu_custom_call.1} parent=5 // pred_check_branch
        %120 = sbr.rel (%p117) target = $region24
      $region23: #{tpu_custom_call.1} parent=5 // pred_region
        %s121 = ssub.s32 %s13, 1
        %s122 = sand.u32 %s26, 1
        %s123 = scalar_lea.sflag [#allocation3], %s122
        %s124 = sand.u32 %s26, 1
        %s125 = smul.addr %s124, 2432
        %s126 = scalar_lea.vmem [#allocation2], %s125
        // Predicated region
        $region25: #{tpu_custom_call.1} parent=23 // pred_check
          %p127 = pneg %p39
        $region26: #{tpu_custom_call.1} parent=23 // pred_check_branch
          %129 = sbr.rel (%p127) target = $region28
        $region27: #{tpu_custom_call.1} parent=23 // pred_region
          %131 = dma.done %s123, 38912
        $region28: #{tpu_custom_call.1} parent=23 // pred_fallthru
          _
        %s132 = sand.u32 %s26, 1
        %s133 = scalar_lea.sflag [#allocation3], %s132
        %s134 = sand.u32 %s26, 1
        %s135 = smul.addr %s134, 2432
        %s136 = scalar_lea.vmem [#allocation2], %s135
        %p137 = pneg %p39
        %p138 = pneg %p36
        %p139 = pneg %p65
        %p140 = pneg %p62
        %s141 = sand.u32 %s52, 1
        %s142 = scalar_lea.sflag [#allocation4], %s141
        %s143 = sand.u32 %s52, 1
        %s144 = smul.addr %s143, 2432
        %s145 = scalar_lea.vmem [#allocation5], %s144
        %s146 = smul.u32 38, %s18
        %s147 = ssub.s32 75, %s146
        %p148 = scmp.lt.s32.totalorder %s147, 38
        %s149 = scalar_select %p148, %s147, 38
        %s150 = smul.u32 8, %s149
        %s151 = smul.u32 %s150, 8
        %s152 = smul.u32 38, %s18
        %s153 = ssub.s32 75, %s152
        %p154 = scmp.lt.s32.totalorder %s153, 38
        %s155 = scalar_select %p154, %s153, 38
        %s156 = smul.u32 8, %s155
        %s157 = smul.u32 %s156, 8
        %v158 = vld [vmem:[%s126] sm:$0xff]
        %v159 = vld [vmem:[%s126 + $0x8] sm:$0xff]
        %v160 = vld [vmem:[%s126 + $0x10] sm:$0xff]
        %v161 = vld [vmem:[%s126 + $0x18] sm:$0xff]
        %v162 = vld [vmem:[%s126 + $0x20] sm:$0xff]
        %v163 = vld [vmem:[%s126 + $0x28] sm:$0xff]
        %v164 = vld [vmem:[%s126 + $0x30] sm:$0xff]
        %v165 = vld [vmem:[%s126 + $0x38] sm:$0xff]
        %v166 = vld [vmem:[%s126 + $0x40] sm:$0xff]
        %v167 = vld [vmem:[%s126 + $0x48] sm:$0xff]
        %v168 = vld [vmem:[%s126 + $0x50] sm:$0xff]
        %v169 = vld [vmem:[%s126 + $0x58] sm:$0xff]
        %v170 = vld [vmem:[%s126 + $0x60] sm:$0xff]
        %v171 = vld [vmem:[%s126 + $0x68] sm:$0xff]
        %v172 = vld [vmem:[%s126 + $0x70] sm:$0xff]
        %v173 = vld [vmem:[%s126 + $0x78] sm:$0xff]
        %v174 = vld [vmem:[%s126 + $0x80] sm:$0xff]
        %v175 = vld [vmem:[%s126 + $0x88] sm:$0xff]
        %v176 = vld [vmem:[%s126 + $0x90] sm:$0xff]
        %v177 = vld [vmem:[%s126 + $0x98] sm:$0xff]
        %v178 = vld [vmem:[%s126 + $0xa0] sm:$0xff]
        %v179 = vld [vmem:[%s126 + $0xa8] sm:$0xff]
        %v180 = vld [vmem:[%s126 + $0xb0] sm:$0xff]
        %v181 = vld [vmem:[%s126 + $0xb8] sm:$0xff]
        %v182 = vld [vmem:[%s126 + $0xc0] sm:$0xff]
        %v183 = vld [vmem:[%s126 + $0xc8] sm:$0xff]
        %v184 = vld [vmem:[%s126 + $0xd0] sm:$0xff]
        %v185 = vld [vmem:[%s126 + $0xd8] sm:$0xff]
        %v186 = vld [vmem:[%s126 + $0xe0] sm:$0xff]
        %v187 = vld [vmem:[%s126 + $0xe8] sm:$0xff]
        %v188 = vld [vmem:[%s126 + $0xf0] sm:$0xff]
        %v189 = vld [vmem:[%s126 + $0xf8] sm:$0xff]
        %v190 = vld [vmem:[%s126 + $0x100] sm:$0xff]
        %v191 = vld [vmem:[%s126 + $0x108] sm:$0xff]
        %v192 = vld [vmem:[%s126 + $0x110] sm:$0xff]
        %v193 = vld [vmem:[%s126 + $0x118] sm:$0xff]
        %v194 = vld [vmem:[%s126 + $0x120] sm:$0xff]
        %v195 = vld [vmem:[%s126 + $0x128] sm:$0xff]
        %v196 = vld [vmem:[%s126 + $0x130] sm:$0xff]
        %v197 = vld [vmem:[%s126 + $0x138] sm:$0xff]
        %v198 = vld [vmem:[%s126 + $0x140] sm:$0xff]
        %v199 = vld [vmem:[%s126 + $0x148] sm:$0xff]
        %v200 = vld [vmem:[%s126 + $0x150] sm:$0xff]
        %v201 = vld [vmem:[%s126 + $0x158] sm:$0xff]
        %v202 = vld [vmem:[%s126 + $0x160] sm:$0xff]
        %v203 = vld [vmem:[%s126 + $0x168] sm:$0xff]
        %v204 = vld [vmem:[%s126 + $0x170] sm:$0xff]
        %v205 = vld [vmem:[%s126 + $0x178] sm:$0xff]
        %v206 = vld [vmem:[%s126 + $0x180] sm:$0xff]
        %v207 = vld [vmem:[%s126 + $0x188] sm:$0xff]
        %v208 = vld [vmem:[%s126 + $0x190] sm:$0xff]
        %v209 = vld [vmem:[%s126 + $0x198] sm:$0xff]
        %v210 = vld [vmem:[%s126 + $0x1a0] sm:$0xff]
        %v211 = vld [vmem:[%s126 + $0x1a8] sm:$0xff]
        %v212 = vld [vmem:[%s126 + $0x1b0] sm:$0xff]
        %v213 = vld [vmem:[%s126 + $0x1b8] sm:$0xff]
        %v214 = vld [vmem:[%s126 + $0x1c0] sm:$0xff]
        %v215 = vld [vmem:[%s126 + $0x1c8] sm:$0xff]
        %v216 = vld [vmem:[%s126 + $0x1d0] sm:$0xff]
        %v217 = vld [vmem:[%s126 + $0x1d8] sm:$0xff]
        %v218 = vld [vmem:[%s126 + $0x1e0] sm:$0xff]
        %v219 = vld [vmem:[%s126 + $0x1e8] sm:$0xff]
        %v220 = vld [vmem:[%s126 + $0x1f0] sm:$0xff]
        %v221 = vld [vmem:[%s126 + $0x1f8] sm:$0xff]
        %v222 = vld [vmem:[%s126 + $0x200] sm:$0xff]
        %v223 = vld [vmem:[%s126 + $0x208] sm:$0xff]
        %v224 = vld [vmem:[%s126 + $0x210] sm:$0xff]
        %v225 = vld [vmem:[%s126 + $0x218] sm:$0xff]
        %v226 = vld [vmem:[%s126 + $0x220] sm:$0xff]
        %v227 = vld [vmem:[%s126 + $0x228] sm:$0xff]
        %v228 = vld [vmem:[%s126 + $0x230] sm:$0xff]
        %v229 = vld [vmem:[%s126 + $0x238] sm:$0xff]
        %v230 = vld [vmem:[%s126 + $0x240] sm:$0xff]
        %v231 = vld [vmem:[%s126 + $0x248] sm:$0xff]
        %v232 = vld [vmem:[%s126 + $0x250] sm:$0xff]
        %v233 = vld [vmem:[%s126 + $0x258] sm:$0xff]
        %v234 = vld [vmem:[%s126 + $0x260] sm:$0xff]
        %v235 = vld [vmem:[%s126 + $0x268] sm:$0xff]
        %v236 = vld [vmem:[%s126 + $0x270] sm:$0xff]
        %v237 = vld [vmem:[%s126 + $0x278] sm:$0xff]
        %v238 = vld [vmem:[%s126 + $0x280] sm:$0xff]
        %v239 = vld [vmem:[%s126 + $0x288] sm:$0xff]
        %v240 = vld [vmem:[%s126 + $0x290] sm:$0xff]
        %v241 = vld [vmem:[%s126 + $0x298] sm:$0xff]
        %v242 = vld [vmem:[%s126 + $0x2a0] sm:$0xff]
        %v243 = vld [vmem:[%s126 + $0x2a8] sm:$0xff]
        %v244 = vld [vmem:[%s126 + $0x2b0] sm:$0xff]
        %v245 = vld [vmem:[%s126 + $0x2b8] sm:$0xff]
        %v246 = vld [vmem:[%s126 + $0x2c0] sm:$0xff]
        %v247 = vld [vmem:[%s126 + $0x2c8] sm:$0xff]
        %v248 = vld [vmem:[%s126 + $0x2d0] sm:$0xff]
        %v249 = vld [vmem:[%s126 + $0x2d8] sm:$0xff]
        %v250 = vld [vmem:[%s126 + $0x2e0] sm:$0xff]
        %v251 = vld [vmem:[%s126 + $0x2e8] sm:$0xff]
        %v252 = vld [vmem:[%s126 + $0x2f0] sm:$0xff]
        %v253 = vld [vmem:[%s126 + $0x2f8] sm:$0xff]
        %v254 = vld [vmem:[%s126 + $0x300] sm:$0xff]
        %v255 = vld [vmem:[%s126 + $0x308] sm:$0xff]
        %v256 = vld [vmem:[%s126 + $0x310] sm:$0xff]
        %v257 = vld [vmem:[%s126 + $0x318] sm:$0xff]
        %v258 = vld [vmem:[%s126 + $0x320] sm:$0xff]
        %v259 = vld [vmem:[%s126 + $0x328] sm:$0xff]
        %v260 = vld [vmem:[%s126 + $0x330] sm:$0xff]
        %v261 = vld [vmem:[%s126 + $0x338] sm:$0xff]
        %v262 = vld [vmem:[%s126 + $0x340] sm:$0xff]
        %v263 = vld [vmem:[%s126 + $0x348] sm:$0xff]
        %v264 = vld [vmem:[%s126 + $0x350] sm:$0xff]
        %v265 = vld [vmem:[%s126 + $0x358] sm:$0xff]
        %v266 = vld [vmem:[%s126 + $0x360] sm:$0xff]
        %v267 = vld [vmem:[%s126 + $0x368] sm:$0xff]
        %v268 = vld [vmem:[%s126 + $0x370] sm:$0xff]
        %v269 = vld [vmem:[%s126 + $0x378] sm:$0xff]
        %v270 = vld [vmem:[%s126 + $0x380] sm:$0xff]
        %v271 = vld [vmem:[%s126 + $0x388] sm:$0xff]
        %v272 = vld [vmem:[%s126 + $0x390] sm:$0xff]
        %v273 = vld [vmem:[%s126 + $0x398] sm:$0xff]
        %v274 = vld [vmem:[%s126 + $0x3a0] sm:$0xff]
        %v275 = vld [vmem:[%s126 + $0x3a8] sm:$0xff]
        %v276 = vld [vmem:[%s126 + $0x3b0] sm:$0xff]
        %v277 = vld [vmem:[%s126 + $0x3b8] sm:$0xff]
        %v278 = vld [vmem:[%s126 + $0x3c0] sm:$0xff]
        %v279 = vld [vmem:[%s126 + $0x3c8] sm:$0xff]
        %v280 = vld [vmem:[%s126 + $0x3d0] sm:$0xff]
        %v281 = vld [vmem:[%s126 + $0x3d8] sm:$0xff]
        %v282 = vld [vmem:[%s126 + $0x3e0] sm:$0xff]
        %v283 = vld [vmem:[%s126 + $0x3e8] sm:$0xff]
        %v284 = vld [vmem:[%s126 + $0x3f0] sm:$0xff]
        %v285 = vld [vmem:[%s126 + $0x3f8] sm:$0xff]
        %v286 = vld [vmem:[%s126 + $0x400] sm:$0xff]
        %v287 = vld [vmem:[%s126 + $0x408] sm:$0xff]
        %v288 = vld [vmem:[%s126 + $0x410] sm:$0xff]
        %v289 = vld [vmem:[%s126 + $0x418] sm:$0xff]
        %v290 = vld [vmem:[%s126 + $0x420] sm:$0xff]
        %v291 = vld [vmem:[%s126 + $0x428] sm:$0xff]
        %v292 = vld [vmem:[%s126 + $0x430] sm:$0xff]
        %v293 = vld [vmem:[%s126 + $0x438] sm:$0xff]
        %v294 = vld [vmem:[%s126 + $0x440] sm:$0xff]
        %v295 = vld [vmem:[%s126 + $0x448] sm:$0xff]
        %v296 = vld [vmem:[%s126 + $0x450] sm:$0xff]
        %v297 = vld [vmem:[%s126 + $0x458] sm:$0xff]
        %v298 = vld [vmem:[%s126 + $0x460] sm:$0xff]
        %v299 = vld [vmem:[%s126 + $0x468] sm:$0xff]
        %v300 = vld [vmem:[%s126 + $0x470] sm:$0xff]
        %v301 = vld [vmem:[%s126 + $0x478] sm:$0xff]
        %v302 = vld [vmem:[%s126 + $0x480] sm:$0xff]
        %v303 = vld [vmem:[%s126 + $0x488] sm:$0xff]
        %v304 = vld [vmem:[%s126 + $0x490] sm:$0xff]
        %v305 = vld [vmem:[%s126 + $0x498] sm:$0xff]
        %v306 = vld [vmem:[%s126 + $0x4a0] sm:$0xff]
        %v307 = vld [vmem:[%s126 + $0x4a8] sm:$0xff]
        %v308 = vld [vmem:[%s126 + $0x4b0] sm:$0xff]
        %v309 = vld [vmem:[%s126 + $0x4b8] sm:$0xff]
        %v310 = vld [vmem:[%s126 + $0x4c0] sm:$0xff]
        %v311 = vld [vmem:[%s126 + $0x4c8] sm:$0xff]
        %v312 = vld [vmem:[%s126 + $0x4d0] sm:$0xff]
        %v313 = vld [vmem:[%s126 + $0x4d8] sm:$0xff]
        %v314 = vld [vmem:[%s126 + $0x4e0] sm:$0xff]
        %v315 = vld [vmem:[%s126 + $0x4e8] sm:$0xff]
        %v316 = vld [vmem:[%s126 + $0x4f0] sm:$0xff]
        %v317 = vld [vmem:[%s126 + $0x4f8] sm:$0xff]
        %v318 = vld [vmem:[%s126 + $0x500] sm:$0xff]
        %v319 = vld [vmem:[%s126 + $0x508] sm:$0xff]
        %v320 = vld [vmem:[%s126 + $0x510] sm:$0xff]
        %v321 = vld [vmem:[%s126 + $0x518] sm:$0xff]
        %v322 = vld [vmem:[%s126 + $0x520] sm:$0xff]
        %v323 = vld [vmem:[%s126 + $0x528] sm:$0xff]
        %v324 = vld [vmem:[%s126 + $0x530] sm:$0xff]
        %v325 = vld [vmem:[%s126 + $0x538] sm:$0xff]
        %v326 = vld [vmem:[%s126 + $0x540] sm:$0xff]
        %v327 = vld [vmem:[%s126 + $0x548] sm:$0xff]
        %v328 = vld [vmem:[%s126 + $0x550] sm:$0xff]
        %v329 = vld [vmem:[%s126 + $0x558] sm:$0xff]
        %v330 = vld [vmem:[%s126 + $0x560] sm:$0xff]
        %v331 = vld [vmem:[%s126 + $0x568] sm:$0xff]
        %v332 = vld [vmem:[%s126 + $0x570] sm:$0xff]
        %v333 = vld [vmem:[%s126 + $0x578] sm:$0xff]
        %v334 = vld [vmem:[%s126 + $0x580] sm:$0xff]
        %v335 = vld [vmem:[%s126 + $0x588] sm:$0xff]
        %v336 = vld [vmem:[%s126 + $0x590] sm:$0xff]
        %v337 = vld [vmem:[%s126 + $0x598] sm:$0xff]
        %v338 = vld [vmem:[%s126 + $0x5a0] sm:$0xff]
        %v339 = vld [vmem:[%s126 + $0x5a8] sm:$0xff]
        %v340 = vld [vmem:[%s126 + $0x5b0] sm:$0xff]
        %v341 = vld [vmem:[%s126 + $0x5b8] sm:$0xff]
        %v342 = vld [vmem:[%s126 + $0x5c0] sm:$0xff]
        %v343 = vld [vmem:[%s126 + $0x5c8] sm:$0xff]
        %v344 = vld [vmem:[%s126 + $0x5d0] sm:$0xff]
        %v345 = vld [vmem:[%s126 + $0x5d8] sm:$0xff]
        %v346 = vld [vmem:[%s126 + $0x5e0] sm:$0xff]
        %v347 = vld [vmem:[%s126 + $0x5e8] sm:$0xff]
        %v348 = vld [vmem:[%s126 + $0x5f0] sm:$0xff]
        %v349 = vld [vmem:[%s126 + $0x5f8] sm:$0xff]
        %v350 = vld [vmem:[%s126 + $0x600] sm:$0xff]
        %v351 = vld [vmem:[%s126 + $0x608] sm:$0xff]
        %v352 = vld [vmem:[%s126 + $0x610] sm:$0xff]
        %v353 = vld [vmem:[%s126 + $0x618] sm:$0xff]
        %v354 = vld [vmem:[%s126 + $0x620] sm:$0xff]
        %v355 = vld [vmem:[%s126 + $0x628] sm:$0xff]
        %v356 = vld [vmem:[%s126 + $0x630] sm:$0xff]
        %v357 = vld [vmem:[%s126 + $0x638] sm:$0xff]
        %v358 = vld [vmem:[%s126 + $0x640] sm:$0xff]
        %v359 = vld [vmem:[%s126 + $0x648] sm:$0xff]
        %v360 = vld [vmem:[%s126 + $0x650] sm:$0xff]
        %v361 = vld [vmem:[%s126 + $0x658] sm:$0xff]
        %v362 = vld [vmem:[%s126 + $0x660] sm:$0xff]
        %v363 = vld [vmem:[%s126 + $0x668] sm:$0xff]
        %v364 = vld [vmem:[%s126 + $0x670] sm:$0xff]
        %v365 = vld [vmem:[%s126 + $0x678] sm:$0xff]
        %v366 = vld [vmem:[%s126 + $0x680] sm:$0xff]
        %v367 = vld [vmem:[%s126 + $0x688] sm:$0xff]
        %v368 = vld [vmem:[%s126 + $0x690] sm:$0xff]
        %v369 = vld [vmem:[%s126 + $0x698] sm:$0xff]
        %v370 = vld [vmem:[%s126 + $0x6a0] sm:$0xff]
        %v371 = vld [vmem:[%s126 + $0x6a8] sm:$0xff]
        %v372 = vld [vmem:[%s126 + $0x6b0] sm:$0xff]
        %v373 = vld [vmem:[%s126 + $0x6b8] sm:$0xff]
        %v374 = vld [vmem:[%s126 + $0x6c0] sm:$0xff]
        %v375 = vld [vmem:[%s126 + $0x6c8] sm:$0xff]
        %v376 = vld [vmem:[%s126 + $0x6d0] sm:$0xff]
        %v377 = vld [vmem:[%s126 + $0x6d8] sm:$0xff]
        %v378 = vld [vmem:[%s126 + $0x6e0] sm:$0xff]
        %v379 = vld [vmem:[%s126 + $0x6e8] sm:$0xff]
        %v380 = vld [vmem:[%s126 + $0x6f0] sm:$0xff]
        %v381 = vld [vmem:[%s126 + $0x6f8] sm:$0xff]
        %v382 = vld [vmem:[%s126 + $0x700] sm:$0xff]
        %v383 = vld [vmem:[%s126 + $0x708] sm:$0xff]
        %v384 = vld [vmem:[%s126 + $0x710] sm:$0xff]
        %v385 = vld [vmem:[%s126 + $0x718] sm:$0xff]
        %v386 = vld [vmem:[%s126 + $0x720] sm:$0xff]
        %v387 = vld [vmem:[%s126 + $0x728] sm:$0xff]
        %v388 = vld [vmem:[%s126 + $0x730] sm:$0xff]
        %v389 = vld [vmem:[%s126 + $0x738] sm:$0xff]
        %v390 = vld [vmem:[%s126 + $0x740] sm:$0xff]
        %v391 = vld [vmem:[%s126 + $0x748] sm:$0xff]
        %v392 = vld [vmem:[%s126 + $0x750] sm:$0xff]
        %v393 = vld [vmem:[%s126 + $0x758] sm:$0xff]
        %v394 = vld [vmem:[%s126 + $0x760] sm:$0xff]
        %v395 = vld [vmem:[%s126 + $0x768] sm:$0xff]
        %v396 = vld [vmem:[%s126 + $0x770] sm:$0xff]
        %v397 = vld [vmem:[%s126 + $0x778] sm:$0xff]
        %v398 = vld [vmem:[%s126 + $0x780] sm:$0xff]
        %v399 = vld [vmem:[%s126 + $0x788] sm:$0xff]
        %v400 = vld [vmem:[%s126 + $0x790] sm:$0xff]
        %v401 = vld [vmem:[%s126 + $0x798] sm:$0xff]
        %v402 = vld [vmem:[%s126 + $0x7a0] sm:$0xff]
        %v403 = vld [vmem:[%s126 + $0x7a8] sm:$0xff]
        %v404 = vld [vmem:[%s126 + $0x7b0] sm:$0xff]
        %v405 = vld [vmem:[%s126 + $0x7b8] sm:$0xff]
        %v406 = vld [vmem:[%s126 + $0x7c0] sm:$0xff]
        %v407 = vld [vmem:[%s126 + $0x7c8] sm:$0xff]
        %v408 = vld [vmem:[%s126 + $0x7d0] sm:$0xff]
        %v409 = vld [vmem:[%s126 + $0x7d8] sm:$0xff]
        %v410 = vld [vmem:[%s126 + $0x7e0] sm:$0xff]
        %v411 = vld [vmem:[%s126 + $0x7e8] sm:$0xff]
        %v412 = vld [vmem:[%s126 + $0x7f0] sm:$0xff]
        %v413 = vld [vmem:[%s126 + $0x7f8] sm:$0xff]
        %v414 = vld [vmem:[%s126 + $0x800] sm:$0xff]
        %v415 = vld [vmem:[%s126 + $0x808] sm:$0xff]
        %v416 = vld [vmem:[%s126 + $0x810] sm:$0xff]
        %v417 = vld [vmem:[%s126 + $0x818] sm:$0xff]
        %v418 = vld [vmem:[%s126 + $0x820] sm:$0xff]
        %v419 = vld [vmem:[%s126 + $0x828] sm:$0xff]
        %v420 = vld [vmem:[%s126 + $0x830] sm:$0xff]
        %v421 = vld [vmem:[%s126 + $0x838] sm:$0xff]
        %v422 = vld [vmem:[%s126 + $0x840] sm:$0xff]
        %v423 = vld [vmem:[%s126 + $0x848] sm:$0xff]
        %v424 = vld [vmem:[%s126 + $0x850] sm:$0xff]
        %v425 = vld [vmem:[%s126 + $0x858] sm:$0xff]
        %v426 = vld [vmem:[%s126 + $0x860] sm:$0xff]
        %v427 = vld [vmem:[%s126 + $0x868] sm:$0xff]
        %v428 = vld [vmem:[%s126 + $0x870] sm:$0xff]
        %v429 = vld [vmem:[%s126 + $0x878] sm:$0xff]
        %v430 = vld [vmem:[%s126 + $0x880] sm:$0xff]
        %v431 = vld [vmem:[%s126 + $0x888] sm:$0xff]
        %v432 = vld [vmem:[%s126 + $0x890] sm:$0xff]
        %v433 = vld [vmem:[%s126 + $0x898] sm:$0xff]
        %v434 = vld [vmem:[%s126 + $0x8a0] sm:$0xff]
        %v435 = vld [vmem:[%s126 + $0x8a8] sm:$0xff]
        %v436 = vld [vmem:[%s126 + $0x8b0] sm:$0xff]
        %v437 = vld [vmem:[%s126 + $0x8b8] sm:$0xff]
        %v438 = vld [vmem:[%s126 + $0x8c0] sm:$0xff]
        %v439 = vld [vmem:[%s126 + $0x8c8] sm:$0xff]
        %v440 = vld [vmem:[%s126 + $0x8d0] sm:$0xff]
        %v441 = vld [vmem:[%s126 + $0x8d8] sm:$0xff]
        %v442 = vld [vmem:[%s126 + $0x8e0] sm:$0xff]
        %v443 = vld [vmem:[%s126 + $0x8e8] sm:$0xff]
        %v444 = vld [vmem:[%s126 + $0x8f0] sm:$0xff]
        %v445 = vld [vmem:[%s126 + $0x8f8] sm:$0xff]
        %v446 = vld [vmem:[%s126 + $0x900] sm:$0xff]
        %v447 = vld [vmem:[%s126 + $0x908] sm:$0xff]
        %v448 = vld [vmem:[%s126 + $0x910] sm:$0xff]
        %v449 = vld [vmem:[%s126 + $0x918] sm:$0xff]
        %v450 = vld [vmem:[%s126 + $0x920] sm:$0xff]
        %v451 = vld [vmem:[%s126 + $0x928] sm:$0xff]
        %v452 = vld [vmem:[%s126 + $0x930] sm:$0xff]
        %v453 = vld [vmem:[%s126 + $0x938] sm:$0xff]
        %v454 = vld [vmem:[%s126 + $0x940] sm:$0xff]
        %v455 = vld [vmem:[%s126 + $0x948] sm:$0xff]
        %v456 = vld [vmem:[%s126 + $0x950] sm:$0xff]
        %v457 = vld [vmem:[%s126 + $0x958] sm:$0xff]
        %v458 = vld [vmem:[%s126 + $0x960] sm:$0xff]
        %v459 = vld [vmem:[%s126 + $0x968] sm:$0xff]
        %v460 = vld [vmem:[%s126 + $0x970] sm:$0xff]
        %v461 = vld [vmem:[%s126 + $0x978] sm:$0xff]
        %v462 = vround.ne.pseudo %v158
        %v463 = vround.ne.pseudo %v159
        %v464 = vround.ne.pseudo %v160
        %v465 = vround.ne.pseudo %v161
        %v466 = vround.ne.pseudo %v162
        %v467 = vround.ne.pseudo %v163
        %v468 = vround.ne.pseudo %v164
        %v469 = vround.ne.pseudo %v165
        %v470 = vround.ne.pseudo %v166
        %v471 = vround.ne.pseudo %v167
        %v472 = vround.ne.pseudo %v168
        %v473 = vround.ne.pseudo %v169
        %v474 = vround.ne.pseudo %v170
        %v475 = vround.ne.pseudo %v171
        %v476 = vround.ne.pseudo %v172
        %v477 = vround.ne.pseudo %v173
        %v478 = vround.ne.pseudo %v174
        %v479 = vround.ne.pseudo %v175
        %v480 = vround.ne.pseudo %v176
        %v481 = vround.ne.pseudo %v177
        %v482 = vround.ne.pseudo %v178
        %v483 = vround.ne.pseudo %v179
        %v484 = vround.ne.pseudo %v180
        %v485 = vround.ne.pseudo %v181
        %v486 = vround.ne.pseudo %v182
        %v487 = vround.ne.pseudo %v183
        %v488 = vround.ne.pseudo %v184
        %v489 = vround.ne.pseudo %v185
        %v490 = vround.ne.pseudo %v186
        %v491 = vround.ne.pseudo %v187
        %v492 = vround.ne.pseudo %v188
        %v493 = vround.ne.pseudo %v189
        %v494 = vround.ne.pseudo %v190
        %v495 = vround.ne.pseudo %v191
        %v496 = vround.ne.pseudo %v192
        %v497 = vround.ne.pseudo %v193
        %v498 = vround.ne.pseudo %v194
        %v499 = vround.ne.pseudo %v195
        %v500 = vround.ne.pseudo %v196
        %v501 = vround.ne.pseudo %v197
        %v502 = vround.ne.pseudo %v198
        %v503 = vround.ne.pseudo %v199
        %v504 = vround.ne.pseudo %v200
        %v505 = vround.ne.pseudo %v201
        %v506 = vround.ne.pseudo %v202
        %v507 = vround.ne.pseudo %v203
        %v508 = vround.ne.pseudo %v204
        %v509 = vround.ne.pseudo %v205
        %v510 = vround.ne.pseudo %v206
        %v511 = vround.ne.pseudo %v207
        %v512 = vround.ne.pseudo %v208
        %v513 = vround.ne.pseudo %v209
        %v514 = vround.ne.pseudo %v210
        %v515 = vround.ne.pseudo %v211
        %v516 = vround.ne.pseudo %v212
        %v517 = vround.ne.pseudo %v213
        %v518 = vround.ne.pseudo %v214
        %v519 = vround.ne.pseudo %v215
        %v520 = vround.ne.pseudo %v216
        %v521 = vround.ne.pseudo %v217
        %v522 = vround.ne.pseudo %v218
        %v523 = vround.ne.pseudo %v219
        %v524 = vround.ne.pseudo %v220
        %v525 = vround.ne.pseudo %v221
        %v526 = vround.ne.pseudo %v222
        %v527 = vround.ne.pseudo %v223
        %v528 = vround.ne.pseudo %v224
        %v529 = vround.ne.pseudo %v225
        %v530 = vround.ne.pseudo %v226
        %v531 = vround.ne.pseudo %v227
        %v532 = vround.ne.pseudo %v228
        %v533 = vround.ne.pseudo %v229
        %v534 = vround.ne.pseudo %v230
        %v535 = vround.ne.pseudo %v231
        %v536 = vround.ne.pseudo %v232
        %v537 = vround.ne.pseudo %v233
        %v538 = vround.ne.pseudo %v234
        %v539 = vround.ne.pseudo %v235
        %v540 = vround.ne.pseudo %v236
        %v541 = vround.ne.pseudo %v237
        %v542 = vround.ne.pseudo %v238
        %v543 = vround.ne.pseudo %v239
        %v544 = vround.ne.pseudo %v240
        %v545 = vround.ne.pseudo %v241
        %v546 = vround.ne.pseudo %v242
        %v547 = vround.ne.pseudo %v243
        %v548 = vround.ne.pseudo %v244
        %v549 = vround.ne.pseudo %v245
        %v550 = vround.ne.pseudo %v246
        %v551 = vround.ne.pseudo %v247
        %v552 = vround.ne.pseudo %v248
        %v553 = vround.ne.pseudo %v249
        %v554 = vround.ne.pseudo %v250
        %v555 = vround.ne.pseudo %v251
        %v556 = vround.ne.pseudo %v252
        %v557 = vround.ne.pseudo %v253
        %v558 = vround.ne.pseudo %v254
        %v559 = vround.ne.pseudo %v255
        %v560 = vround.ne.pseudo %v256
        %v561 = vround.ne.pseudo %v257
        %v562 = vround.ne.pseudo %v258
        %v563 = vround.ne.pseudo %v259
        %v564 = vround.ne.pseudo %v260
        %v565 = vround.ne.pseudo %v261
        %v566 = vround.ne.pseudo %v262
        %v567 = vround.ne.pseudo %v263
        %v568 = vround.ne.pseudo %v264
        %v569 = vround.ne.pseudo %v265
        %v570 = vround.ne.pseudo %v266
        %v571 = vround.ne.pseudo %v267
        %v572 = vround.ne.pseudo %v268
        %v573 = vround.ne.pseudo %v269
        %v574 = vround.ne.pseudo %v270
        %v575 = vround.ne.pseudo %v271
        %v576 = vround.ne.pseudo %v272
        %v577 = vround.ne.pseudo %v273
        %v578 = vround.ne.pseudo %v274
        %v579 = vround.ne.pseudo %v275
        %v580 = vround.ne.pseudo %v276
        %v581 = vround.ne.pseudo %v277
        %v582 = vround.ne.pseudo %v278
        %v583 = vround.ne.pseudo %v279
        %v584 = vround.ne.pseudo %v280
        %v585 = vround.ne.pseudo %v281
        %v586 = vround.ne.pseudo %v282
        %v587 = vround.ne.pseudo %v283
        %v588 = vround.ne.pseudo %v284
        %v589 = vround.ne.pseudo %v285
        %v590 = vround.ne.pseudo %v286
        %v591 = vround.ne.pseudo %v287
        %v592 = vround.ne.pseudo %v288
        %v593 = vround.ne.pseudo %v289
        %v594 = vround.ne.pseudo %v290
        %v595 = vround.ne.pseudo %v291
        %v596 = vround.ne.pseudo %v292
        %v597 = vround.ne.pseudo %v293
        %v598 = vround.ne.pseudo %v294
        %v599 = vround.ne.pseudo %v295
        %v600 = vround.ne.pseudo %v296
        %v601 = vround.ne.pseudo %v297
        %v602 = vround.ne.pseudo %v298
        %v603 = vround.ne.pseudo %v299
        %v604 = vround.ne.pseudo %v300
        %v605 = vround.ne.pseudo %v301
        %v606 = vround.ne.pseudo %v302
        %v607 = vround.ne.pseudo %v303
        %v608 = vround.ne.pseudo %v304
        %v609 = vround.ne.pseudo %v305
        %v610 = vround.ne.pseudo %v306
        %v611 = vround.ne.pseudo %v307
        %v612 = vround.ne.pseudo %v308
        %v613 = vround.ne.pseudo %v309
        %v614 = vround.ne.pseudo %v310
        %v615 = vround.ne.pseudo %v311
        %v616 = vround.ne.pseudo %v312
        %v617 = vround.ne.pseudo %v313
        %v618 = vround.ne.pseudo %v314
        %v619 = vround.ne.pseudo %v315
        %v620 = vround.ne.pseudo %v316
        %v621 = vround.ne.pseudo %v317
        %v622 = vround.ne.pseudo %v318
        %v623 = vround.ne.pseudo %v319
        %v624 = vround.ne.pseudo %v320
        %v625 = vround.ne.pseudo %v321
        %v626 = vround.ne.pseudo %v322
        %v627 = vround.ne.pseudo %v323
        %v628 = vround.ne.pseudo %v324
        %v629 = vround.ne.pseudo %v325
        %v630 = vround.ne.pseudo %v326
        %v631 = vround.ne.pseudo %v327
        %v632 = vround.ne.pseudo %v328
        %v633 = vround.ne.pseudo %v329
        %v634 = vround.ne.pseudo %v330
        %v635 = vround.ne.pseudo %v331
        %v636 = vround.ne.pseudo %v332
        %v637 = vround.ne.pseudo %v333
        %v638 = vround.ne.pseudo %v334
        %v639 = vround.ne.pseudo %v335
        %v640 = vround.ne.pseudo %v336
        %v641 = vround.ne.pseudo %v337
        %v642 = vround.ne.pseudo %v338
        %v643 = vround.ne.pseudo %v339
        %v644 = vround.ne.pseudo %v340
        %v645 = vround.ne.pseudo %v341
        %v646 = vround.ne.pseudo %v342
        %v647 = vround.ne.pseudo %v343
        %v648 = vround.ne.pseudo %v344
        %v649 = vround.ne.pseudo %v345
        %v650 = vround.ne.pseudo %v346
        %v651 = vround.ne.pseudo %v347
        %v652 = vround.ne.pseudo %v348
        %v653 = vround.ne.pseudo %v349
        %v654 = vround.ne.pseudo %v350
        %v655 = vround.ne.pseudo %v351
        %v656 = vround.ne.pseudo %v352
        %v657 = vround.ne.pseudo %v353
        %v658 = vround.ne.pseudo %v354
        %v659 = vround.ne.pseudo %v355
        %v660 = vround.ne.pseudo %v356
        %v661 = vround.ne.pseudo %v357
        %v662 = vround.ne.pseudo %v358
        %v663 = vround.ne.pseudo %v359
        %v664 = vround.ne.pseudo %v360
        %v665 = vround.ne.pseudo %v361
        %v666 = vround.ne.pseudo %v362
        %v667 = vround.ne.pseudo %v363
        %v668 = vround.ne.pseudo %v364
        %v669 = vround.ne.pseudo %v365
        %v670 = vround.ne.pseudo %v366
        %v671 = vround.ne.pseudo %v367
        %v672 = vround.ne.pseudo %v368
        %v673 = vround.ne.pseudo %v369
        %v674 = vround.ne.pseudo %v370
        %v675 = vround.ne.pseudo %v371
        %v676 = vround.ne.pseudo %v372
        %v677 = vround.ne.pseudo %v373
        %v678 = vround.ne.pseudo %v374
        %v679 = vround.ne.pseudo %v375
        %v680 = vround.ne.pseudo %v376
        %v681 = vround.ne.pseudo %v377
        %v682 = vround.ne.pseudo %v378
        %v683 = vround.ne.pseudo %v379
        %v684 = vround.ne.pseudo %v380
        %v685 = vround.ne.pseudo %v381
        %v686 = vround.ne.pseudo %v382
        %v687 = vround.ne.pseudo %v383
        %v688 = vround.ne.pseudo %v384
        %v689 = vround.ne.pseudo %v385
        %v690 = vround.ne.pseudo %v386
        %v691 = vround.ne.pseudo %v387
        %v692 = vround.ne.pseudo %v388
        %v693 = vround.ne.pseudo %v389
        %v694 = vround.ne.pseudo %v390
        %v695 = vround.ne.pseudo %v391
        %v696 = vround.ne.pseudo %v392
        %v697 = vround.ne.pseudo %v393
        %v698 = vround.ne.pseudo %v394
        %v699 = vround.ne.pseudo %v395
        %v700 = vround.ne.pseudo %v396
        %v701 = vround.ne.pseudo %v397
        %v702 = vround.ne.pseudo %v398
        %v703 = vround.ne.pseudo %v399
        %v704 = vround.ne.pseudo %v400
        %v705 = vround.ne.pseudo %v401
        %v706 = vround.ne.pseudo %v402
        %v707 = vround.ne.pseudo %v403
        %v708 = vround.ne.pseudo %v404
        %v709 = vround.ne.pseudo %v405
        %v710 = vround.ne.pseudo %v406
        %v711 = vround.ne.pseudo %v407
        %v712 = vround.ne.pseudo %v408
        %v713 = vround.ne.pseudo %v409
        %v714 = vround.ne.pseudo %v410
        %v715 = vround.ne.pseudo %v411
        %v716 = vround.ne.pseudo %v412
        %v717 = vround.ne.pseudo %v413
        %v718 = vround.ne.pseudo %v414
        %v719 = vround.ne.pseudo %v415
        %v720 = vround.ne.pseudo %v416
        %v721 = vround.ne.pseudo %v417
        %v722 = vround.ne.pseudo %v418
        %v723 = vround.ne.pseudo %v419
        %v724 = vround.ne.pseudo %v420
        %v725 = vround.ne.pseudo %v421
        %v726 = vround.ne.pseudo %v422
        %v727 = vround.ne.pseudo %v423
        %v728 = vround.ne.pseudo %v424
        %v729 = vround.ne.pseudo %v425
        %v730 = vround.ne.pseudo %v426
        %v731 = vround.ne.pseudo %v427
        %v732 = vround.ne.pseudo %v428
        %v733 = vround.ne.pseudo %v429
        %v734 = vround.ne.pseudo %v430
        %v735 = vround.ne.pseudo %v431
        %v736 = vround.ne.pseudo %v432
        %v737 = vround.ne.pseudo %v433
        %v738 = vround.ne.pseudo %v434
        %v739 = vround.ne.pseudo %v435
        %v740 = vround.ne.pseudo %v436
        %v741 = vround.ne.pseudo %v437
        %v742 = vround.ne.pseudo %v438
        %v743 = vround.ne.pseudo %v439
        %v744 = vround.ne.pseudo %v440
        %v745 = vround.ne.pseudo %v441
        %v746 = vround.ne.pseudo %v442
        %v747 = vround.ne.pseudo %v443
        %v748 = vround.ne.pseudo %v444
        %v749 = vround.ne.pseudo %v445
        %v750 = vround.ne.pseudo %v446
        %v751 = vround.ne.pseudo %v447
        %v752 = vround.ne.pseudo %v448
        %v753 = vround.ne.pseudo %v449
        %v754 = vround.ne.pseudo %v450
        %v755 = vround.ne.pseudo %v451
        %v756 = vround.ne.pseudo %v452
        %v757 = vround.ne.pseudo %v453
        %v758 = vround.ne.pseudo %v454
        %v759 = vround.ne.pseudo %v455
        %v760 = vround.ne.pseudo %v456
        %v761 = vround.ne.pseudo %v457
        %v762 = vround.ne.pseudo %v458
        %v763 = vround.ne.pseudo %v459
        %v764 = vround.ne.pseudo %v460
        %v765 = vround.ne.pseudo %v461
        %766 = vst [vmem:[%s145] sm:$0xff] %v462
        %767 = vst [vmem:[%s145 + $0x8] sm:$0xff] %v463
        %768 = vst [vmem:[%s145 + $0x10] sm:$0xff] %v464
        %769 = vst [vmem:[%s145 + $0x18] sm:$0xff] %v465
        %770 = vst [vmem:[%s145 + $0x20] sm:$0xff] %v466
        %771 = vst [vmem:[%s145 + $0x28] sm:$0xff] %v467
        %772 = vst [vmem:[%s145 + $0x30] sm:$0xff] %v468
        %773 = vst [vmem:[%s145 + $0x38] sm:$0xff] %v469
        %774 = vst [vmem:[%s145 + $0x40] sm:$0xff] %v470
        %775 = vst [vmem:[%s145 + $0x48] sm:$0xff] %v471
        %776 = vst [vmem:[%s145 + $0x50] sm:$0xff] %v472
        %777 = vst [vmem:[%s145 + $0x58] sm:$0xff] %v473
        %778 = vst [vmem:[%s145 + $0x60] sm:$0xff] %v474
        %779 = vst [vmem:[%s145 + $0x68] sm:$0xff] %v475
        %780 = vst [vmem:[%s145 + $0x70] sm:$0xff] %v476
        %781 = vst [vmem:[%s145 + $0x78] sm:$0xff] %v477
        %782 = vst [vmem:[%s145 + $0x80] sm:$0xff] %v478
        %783 = vst [vmem:[%s145 + $0x88] sm:$0xff] %v479
        %784 = vst [vmem:[%s145 + $0x90] sm:$0xff] %v480
        %785 = vst [vmem:[%s145 + $0x98] sm:$0xff] %v481
        %786 = vst [vmem:[%s145 + $0xa0] sm:$0xff] %v482
        %787 = vst [vmem:[%s145 + $0xa8] sm:$0xff] %v483
        %788 = vst [vmem:[%s145 + $0xb0] sm:$0xff] %v484
        %789 = vst [vmem:[%s145 + $0xb8] sm:$0xff] %v485
        %790 = vst [vmem:[%s145 + $0xc0] sm:$0xff] %v486
        %791 = vst [vmem:[%s145 + $0xc8] sm:$0xff] %v487
        %792 = vst [vmem:[%s145 + $0xd0] sm:$0xff] %v488
        %793 = vst [vmem:[%s145 + $0xd8] sm:$0xff] %v489
        %794 = vst [vmem:[%s145 + $0xe0] sm:$0xff] %v490
        %795 = vst [vmem:[%s145 + $0xe8] sm:$0xff] %v491
        %796 = vst [vmem:[%s145 + $0xf0] sm:$0xff] %v492
        %797 = vst [vmem:[%s145 + $0xf8] sm:$0xff] %v493
        %798 = vst [vmem:[%s145 + $0x100] sm:$0xff] %v494
        %799 = vst [vmem:[%s145 + $0x108] sm:$0xff] %v495
        %800 = vst [vmem:[%s145 + $0x110] sm:$0xff] %v496
        %801 = vst [vmem:[%s145 + $0x118] sm:$0xff] %v497
        %802 = vst [vmem:[%s145 + $0x120] sm:$0xff] %v498
        %803 = vst [vmem:[%s145 + $0x128] sm:$0xff] %v499
        %804 = vst [vmem:[%s145 + $0x130] sm:$0xff] %v500
        %805 = vst [vmem:[%s145 + $0x138] sm:$0xff] %v501
        %806 = vst [vmem:[%s145 + $0x140] sm:$0xff] %v502
        %807 = vst [vmem:[%s145 + $0x148] sm:$0xff] %v503
        %808 = vst [vmem:[%s145 + $0x150] sm:$0xff] %v504
        %809 = vst [vmem:[%s145 + $0x158] sm:$0xff] %v505
        %810 = vst [vmem:[%s145 + $0x160] sm:$0xff] %v506
        %811 = vst [vmem:[%s145 + $0x168] sm:$0xff] %v507
        %812 = vst [vmem:[%s145 + $0x170] sm:$0xff] %v508
        %813 = vst [vmem:[%s145 + $0x178] sm:$0xff] %v509
        %814 = vst [vmem:[%s145 + $0x180] sm:$0xff] %v510
        %815 = vst [vmem:[%s145 + $0x188] sm:$0xff] %v511
        %816 = vst [vmem:[%s145 + $0x190] sm:$0xff] %v512
        %817 = vst [vmem:[%s145 + $0x198] sm:$0xff] %v513
        %818 = vst [vmem:[%s145 + $0x1a0] sm:$0xff] %v514
        %819 = vst [vmem:[%s145 + $0x1a8] sm:$0xff] %v515
        %820 = vst [vmem:[%s145 + $0x1b0] sm:$0xff] %v516
        %821 = vst [vmem:[%s145 + $0x1b8] sm:$0xff] %v517
        %822 = vst [vmem:[%s145 + $0x1c0] sm:$0xff] %v518
        %823 = vst [vmem:[%s145 + $0x1c8] sm:$0xff] %v519
        %824 = vst [vmem:[%s145 + $0x1d0] sm:$0xff] %v520
        %825 = vst [vmem:[%s145 + $0x1d8] sm:$0xff] %v521
        %826 = vst [vmem:[%s145 + $0x1e0] sm:$0xff] %v522
        %827 = vst [vmem:[%s145 + $0x1e8] sm:$0xff] %v523
        %828 = vst [vmem:[%s145 + $0x1f0] sm:$0xff] %v524
        %829 = vst [vmem:[%s145 + $0x1f8] sm:$0xff] %v525
        %830 = vst [vmem:[%s145 + $0x200] sm:$0xff] %v526
        %831 = vst [vmem:[%s145 + $0x208] sm:$0xff] %v527
        %832 = vst [vmem:[%s145 + $0x210] sm:$0xff] %v528
        %833 = vst [vmem:[%s145 + $0x218] sm:$0xff] %v529
        %834 = vst [vmem:[%s145 + $0x220] sm:$0xff] %v530
        %835 = vst [vmem:[%s145 + $0x228] sm:$0xff] %v531
        %836 = vst [vmem:[%s145 + $0x230] sm:$0xff] %v532
        %837 = vst [vmem:[%s145 + $0x238] sm:$0xff] %v533
        %838 = vst [vmem:[%s145 + $0x240] sm:$0xff] %v534
        %839 = vst [vmem:[%s145 + $0x248] sm:$0xff] %v535
        %840 = vst [vmem:[%s145 + $0x250] sm:$0xff] %v536
        %841 = vst [vmem:[%s145 + $0x258] sm:$0xff] %v537
        %842 = vst [vmem:[%s145 + $0x260] sm:$0xff] %v538
        %843 = vst [vmem:[%s145 + $0x268] sm:$0xff] %v539
        %844 = vst [vmem:[%s145 + $0x270] sm:$0xff] %v540
        %845 = vst [vmem:[%s145 + $0x278] sm:$0xff] %v541
        %846 = vst [vmem:[%s145 + $0x280] sm:$0xff] %v542
        %847 = vst [vmem:[%s145 + $0x288] sm:$0xff] %v543
        %848 = vst [vmem:[%s145 + $0x290] sm:$0xff] %v544
        %849 = vst [vmem:[%s145 + $0x298] sm:$0xff] %v545
        %850 = vst [vmem:[%s145 + $0x2a0] sm:$0xff] %v546
        %851 = vst [vmem:[%s145 + $0x2a8] sm:$0xff] %v547
        %852 = vst [vmem:[%s145 + $0x2b0] sm:$0xff] %v548
        %853 = vst [vmem:[%s145 + $0x2b8] sm:$0xff] %v549
        %854 = vst [vmem:[%s145 + $0x2c0] sm:$0xff] %v550
        %855 = vst [vmem:[%s145 + $0x2c8] sm:$0xff] %v551
        %856 = vst [vmem:[%s145 + $0x2d0] sm:$0xff] %v552
        %857 = vst [vmem:[%s145 + $0x2d8] sm:$0xff] %v553
        %858 = vst [vmem:[%s145 + $0x2e0] sm:$0xff] %v554
        %859 = vst [vmem:[%s145 + $0x2e8] sm:$0xff] %v555
        %860 = vst [vmem:[%s145 + $0x2f0] sm:$0xff] %v556
        %861 = vst [vmem:[%s145 + $0x2f8] sm:$0xff] %v557
        %862 = vst [vmem:[%s145 + $0x300] sm:$0xff] %v558
        %863 = vst [vmem:[%s145 + $0x308] sm:$0xff] %v559
        %864 = vst [vmem:[%s145 + $0x310] sm:$0xff] %v560
        %865 = vst [vmem:[%s145 + $0x318] sm:$0xff] %v561
        %866 = vst [vmem:[%s145 + $0x320] sm:$0xff] %v562
        %867 = vst [vmem:[%s145 + $0x328] sm:$0xff] %v563
        %868 = vst [vmem:[%s145 + $0x330] sm:$0xff] %v564
        %869 = vst [vmem:[%s145 + $0x338] sm:$0xff] %v565
        %870 = vst [vmem:[%s145 + $0x340] sm:$0xff] %v566
        %871 = vst [vmem:[%s145 + $0x348] sm:$0xff] %v567
        %872 = vst [vmem:[%s145 + $0x350] sm:$0xff] %v568
        %873 = vst [vmem:[%s145 + $0x358] sm:$0xff] %v569
        %874 = vst [vmem:[%s145 + $0x360] sm:$0xff] %v570
        %875 = vst [vmem:[%s145 + $0x368] sm:$0xff] %v571
        %876 = vst [vmem:[%s145 + $0x370] sm:$0xff] %v572
        %877 = vst [vmem:[%s145 + $0x378] sm:$0xff] %v573
        %878 = vst [vmem:[%s145 + $0x380] sm:$0xff] %v574
        %879 = vst [vmem:[%s145 + $0x388] sm:$0xff] %v575
        %880 = vst [vmem:[%s145 + $0x390] sm:$0xff] %v576
        %881 = vst [vmem:[%s145 + $0x398] sm:$0xff] %v577
        %882 = vst [vmem:[%s145 + $0x3a0] sm:$0xff] %v578
        %883 = vst [vmem:[%s145 + $0x3a8] sm:$0xff] %v579
        %884 = vst [vmem:[%s145 + $0x3b0] sm:$0xff] %v580
        %885 = vst [vmem:[%s145 + $0x3b8] sm:$0xff] %v581
        %886 = vst [vmem:[%s145 + $0x3c0] sm:$0xff] %v582
        %887 = vst [vmem:[%s145 + $0x3c8] sm:$0xff] %v583
        %888 = vst [vmem:[%s145 + $0x3d0] sm:$0xff] %v584
        %889 = vst [vmem:[%s145 + $0x3d8] sm:$0xff] %v585
        %890 = vst [vmem:[%s145 + $0x3e0] sm:$0xff] %v586
        %891 = vst [vmem:[%s145 + $0x3e8] sm:$0xff] %v587
        %892 = vst [vmem:[%s145 + $0x3f0] sm:$0xff] %v588
        %893 = vst [vmem:[%s145 + $0x3f8] sm:$0xff] %v589
        %894 = vst [vmem:[%s145 + $0x400] sm:$0xff] %v590
        %895 = vst [vmem:[%s145 + $0x408] sm:$0xff] %v591
        %896 = vst [vmem:[%s145 + $0x410] sm:$0xff] %v592
        %897 = vst [vmem:[%s145 + $0x418] sm:$0xff] %v593
        %898 = vst [vmem:[%s145 + $0x420] sm:$0xff] %v594
        %899 = vst [vmem:[%s145 + $0x428] sm:$0xff] %v595
        %900 = vst [vmem:[%s145 + $0x430] sm:$0xff] %v596
        %901 = vst [vmem:[%s145 + $0x438] sm:$0xff] %v597
        %902 = vst [vmem:[%s145 + $0x440] sm:$0xff] %v598
        %903 = vst [vmem:[%s145 + $0x448] sm:$0xff] %v599
        %904 = vst [vmem:[%s145 + $0x450] sm:$0xff] %v600
        %905 = vst [vmem:[%s145 + $0x458] sm:$0xff] %v601
        %906 = vst [vmem:[%s145 + $0x460] sm:$0xff] %v602
        %907 = vst [vmem:[%s145 + $0x468] sm:$0xff] %v603
        %908 = vst [vmem:[%s145 + $0x470] sm:$0xff] %v604
        %909 = vst [vmem:[%s145 + $0x478] sm:$0xff] %v605
        %910 = vst [vmem:[%s145 + $0x480] sm:$0xff] %v606
        %911 = vst [vmem:[%s145 + $0x488] sm:$0xff] %v607
        %912 = vst [vmem:[%s145 + $0x490] sm:$0xff] %v608
        %913 = vst [vmem:[%s145 + $0x498] sm:$0xff] %v609
        %914 = vst [vmem:[%s145 + $0x4a0] sm:$0xff] %v610
        %915 = vst [vmem:[%s145 + $0x4a8] sm:$0xff] %v611
        %916 = vst [vmem:[%s145 + $0x4b0] sm:$0xff] %v612
        %917 = vst [vmem:[%s145 + $0x4b8] sm:$0xff] %v613
        %918 = vst [vmem:[%s145 + $0x4c0] sm:$0xff] %v614
        %919 = vst [vmem:[%s145 + $0x4c8] sm:$0xff] %v615
        %920 = vst [vmem:[%s145 + $0x4d0] sm:$0xff] %v616
        %921 = vst [vmem:[%s145 + $0x4d8] sm:$0xff] %v617
        %922 = vst [vmem:[%s145 + $0x4e0] sm:$0xff] %v618
        %923 = vst [vmem:[%s145 + $0x4e8] sm:$0xff] %v619
        %924 = vst [vmem:[%s145 + $0x4f0] sm:$0xff] %v620
        %925 = vst [vmem:[%s145 + $0x4f8] sm:$0xff] %v621
        %926 = vst [vmem:[%s145 + $0x500] sm:$0xff] %v622
        %927 = vst [vmem:[%s145 + $0x508] sm:$0xff] %v623
        %928 = vst [vmem:[%s145 + $0x510] sm:$0xff] %v624
        %929 = vst [vmem:[%s145 + $0x518] sm:$0xff] %v625
        %930 = vst [vmem:[%s145 + $0x520] sm:$0xff] %v626
        %931 = vst [vmem:[%s145 + $0x528] sm:$0xff] %v627
        %932 = vst [vmem:[%s145 + $0x530] sm:$0xff] %v628
        %933 = vst [vmem:[%s145 + $0x538] sm:$0xff] %v629
        %934 = vst [vmem:[%s145 + $0x540] sm:$0xff] %v630
        %935 = vst [vmem:[%s145 + $0x548] sm:$0xff] %v631
        %936 = vst [vmem:[%s145 + $0x550] sm:$0xff] %v632
        %937 = vst [vmem:[%s145 + $0x558] sm:$0xff] %v633
        %938 = vst [vmem:[%s145 + $0x560] sm:$0xff] %v634
        %939 = vst [vmem:[%s145 + $0x568] sm:$0xff] %v635
        %940 = vst [vmem:[%s145 + $0x570] sm:$0xff] %v636
        %941 = vst [vmem:[%s145 + $0x578] sm:$0xff] %v637
        %942 = vst [vmem:[%s145 + $0x580] sm:$0xff] %v638
        %943 = vst [vmem:[%s145 + $0x588] sm:$0xff] %v639
        %944 = vst [vmem:[%s145 + $0x590] sm:$0xff] %v640
        %945 = vst [vmem:[%s145 + $0x598] sm:$0xff] %v641
        %946 = vst [vmem:[%s145 + $0x5a0] sm:$0xff] %v642
        %947 = vst [vmem:[%s145 + $0x5a8] sm:$0xff] %v643
        %948 = vst [vmem:[%s145 + $0x5b0] sm:$0xff] %v644
        %949 = vst [vmem:[%s145 + $0x5b8] sm:$0xff] %v645
        %950 = vst [vmem:[%s145 + $0x5c0] sm:$0xff] %v646
        %951 = vst [vmem:[%s145 + $0x5c8] sm:$0xff] %v647
        %952 = vst [vmem:[%s145 + $0x5d0] sm:$0xff] %v648
        %953 = vst [vmem:[%s145 + $0x5d8] sm:$0xff] %v649
        %954 = vst [vmem:[%s145 + $0x5e0] sm:$0xff] %v650
        %955 = vst [vmem:[%s145 + $0x5e8] sm:$0xff] %v651
        %956 = vst [vmem:[%s145 + $0x5f0] sm:$0xff] %v652
        %957 = vst [vmem:[%s145 + $0x5f8] sm:$0xff] %v653
        %958 = vst [vmem:[%s145 + $0x600] sm:$0xff] %v654
        %959 = vst [vmem:[%s145 + $0x608] sm:$0xff] %v655
        %960 = vst [vmem:[%s145 + $0x610] sm:$0xff] %v656
        %961 = vst [vmem:[%s145 + $0x618] sm:$0xff] %v657
        %962 = vst [vmem:[%s145 + $0x620] sm:$0xff] %v658
        %963 = vst [vmem:[%s145 + $0x628] sm:$0xff] %v659
        %964 = vst [vmem:[%s145 + $0x630] sm:$0xff] %v660
        %965 = vst [vmem:[%s145 + $0x638] sm:$0xff] %v661
        %966 = vst [vmem:[%s145 + $0x640] sm:$0xff] %v662
        %967 = vst [vmem:[%s145 + $0x648] sm:$0xff] %v663
        %968 = vst [vmem:[%s145 + $0x650] sm:$0xff] %v664
        %969 = vst [vmem:[%s145 + $0x658] sm:$0xff] %v665
        %970 = vst [vmem:[%s145 + $0x660] sm:$0xff] %v666
        %971 = vst [vmem:[%s145 + $0x668] sm:$0xff] %v667
        %972 = vst [vmem:[%s145 + $0x670] sm:$0xff] %v668
        %973 = vst [vmem:[%s145 + $0x678] sm:$0xff] %v669
        %974 = vst [vmem:[%s145 + $0x680] sm:$0xff] %v670
        %975 = vst [vmem:[%s145 + $0x688] sm:$0xff] %v671
        %976 = vst [vmem:[%s145 + $0x690] sm:$0xff] %v672
        %977 = vst [vmem:[%s145 + $0x698] sm:$0xff] %v673
        %978 = vst [vmem:[%s145 + $0x6a0] sm:$0xff] %v674
        %979 = vst [vmem:[%s145 + $0x6a8] sm:$0xff] %v675
        %980 = vst [vmem:[%s145 + $0x6b0] sm:$0xff] %v676
        %981 = vst [vmem:[%s145 + $0x6b8] sm:$0xff] %v677
        %982 = vst [vmem:[%s145 + $0x6c0] sm:$0xff] %v678
        %983 = vst [vmem:[%s145 + $0x6c8] sm:$0xff] %v679
        %984 = vst [vmem:[%s145 + $0x6d0] sm:$0xff] %v680
        %985 = vst [vmem:[%s145 + $0x6d8] sm:$0xff] %v681
        %986 = vst [vmem:[%s145 + $0x6e0] sm:$0xff] %v682
        %987 = vst [vmem:[%s145 + $0x6e8] sm:$0xff] %v683
        %988 = vst [vmem:[%s145 + $0x6f0] sm:$0xff] %v684
        %989 = vst [vmem:[%s145 + $0x6f8] sm:$0xff] %v685
        %990 = vst [vmem:[%s145 + $0x700] sm:$0xff] %v686
        %991 = vst [vmem:[%s145 + $0x708] sm:$0xff] %v687
        %992 = vst [vmem:[%s145 + $0x710] sm:$0xff] %v688
        %993 = vst [vmem:[%s145 + $0x718] sm:$0xff] %v689
        %994 = vst [vmem:[%s145 + $0x720] sm:$0xff] %v690
        %995 = vst [vmem:[%s145 + $0x728] sm:$0xff] %v691
        %996 = vst [vmem:[%s145 + $0x730] sm:$0xff] %v692
        %997 = vst [vmem:[%s145 + $0x738] sm:$0xff] %v693
        %998 = vst [vmem:[%s145 + $0x740] sm:$0xff] %v694
        %999 = vst [vmem:[%s145 + $0x748] sm:$0xff] %v695
        %1000 = vst [vmem:[%s145 + $0x750] sm:$0xff] %v696
        %1001 = vst [vmem:[%s145 + $0x758] sm:$0xff] %v697
        %1002 = vst [vmem:[%s145 + $0x760] sm:$0xff] %v698
        %1003 = vst [vmem:[%s145 + $0x768] sm:$0xff] %v699
        %1004 = vst [vmem:[%s145 + $0x770] sm:$0xff] %v700
        %1005 = vst [vmem:[%s145 + $0x778] sm:$0xff] %v701
        %1006 = vst [vmem:[%s145 + $0x780] sm:$0xff] %v702
        %1007 = vst [vmem:[%s145 + $0x788] sm:$0xff] %v703
        %1008 = vst [vmem:[%s145 + $0x790] sm:$0xff] %v704
        %1009 = vst [vmem:[%s145 + $0x798] sm:$0xff] %v705
        %1010 = vst [vmem:[%s145 + $0x7a0] sm:$0xff] %v706
        %1011 = vst [vmem:[%s145 + $0x7a8] sm:$0xff] %v707
        %1012 = vst [vmem:[%s145 + $0x7b0] sm:$0xff] %v708
        %1013 = vst [vmem:[%s145 + $0x7b8] sm:$0xff] %v709
        %1014 = vst [vmem:[%s145 + $0x7c0] sm:$0xff] %v710
        %1015 = vst [vmem:[%s145 + $0x7c8] sm:$0xff] %v711
        %1016 = vst [vmem:[%s145 + $0x7d0] sm:$0xff] %v712
        %1017 = vst [vmem:[%s145 + $0x7d8] sm:$0xff] %v713
        %1018 = vst [vmem:[%s145 + $0x7e0] sm:$0xff] %v714
        %1019 = vst [vmem:[%s145 + $0x7e8] sm:$0xff] %v715
        %1020 = vst [vmem:[%s145 + $0x7f0] sm:$0xff] %v716
        %1021 = vst [vmem:[%s145 + $0x7f8] sm:$0xff] %v717
        %1022 = vst [vmem:[%s145 + $0x800] sm:$0xff] %v718
        %1023 = vst [vmem:[%s145 + $0x808] sm:$0xff] %v719
        %1024 = vst [vmem:[%s145 + $0x810] sm:$0xff] %v720
        %1025 = vst [vmem:[%s145 + $0x818] sm:$0xff] %v721
        %1026 = vst [vmem:[%s145 + $0x820] sm:$0xff] %v722
        %1027 = vst [vmem:[%s145 + $0x828] sm:$0xff] %v723
        %1028 = vst [vmem:[%s145 + $0x830] sm:$0xff] %v724
        %1029 = vst [vmem:[%s145 + $0x838] sm:$0xff] %v725
        %1030 = vst [vmem:[%s145 + $0x840] sm:$0xff] %v726
        %1031 = vst [vmem:[%s145 + $0x848] sm:$0xff] %v727
        %1032 = vst [vmem:[%s145 + $0x850] sm:$0xff] %v728
        %1033 = vst [vmem:[%s145 + $0x858] sm:$0xff] %v729
        %1034 = vst [vmem:[%s145 + $0x860] sm:$0xff] %v730
        %1035 = vst [vmem:[%s145 + $0x868] sm:$0xff] %v731
        %1036 = vst [vmem:[%s145 + $0x870] sm:$0xff] %v732
        %1037 = vst [vmem:[%s145 + $0x878] sm:$0xff] %v733
        %1038 = vst [vmem:[%s145 + $0x880] sm:$0xff] %v734
        %1039 = vst [vmem:[%s145 + $0x888] sm:$0xff] %v735
        %1040 = vst [vmem:[%s145 + $0x890] sm:$0xff] %v736
        %1041 = vst [vmem:[%s145 + $0x898] sm:$0xff] %v737
        %1042 = vst [vmem:[%s145 + $0x8a0] sm:$0xff] %v738
        %1043 = vst [vmem:[%s145 + $0x8a8] sm:$0xff] %v739
        %1044 = vst [vmem:[%s145 + $0x8b0] sm:$0xff] %v740
        %1045 = vst [vmem:[%s145 + $0x8b8] sm:$0xff] %v741
        %1046 = vst [vmem:[%s145 + $0x8c0] sm:$0xff] %v742
        %1047 = vst [vmem:[%s145 + $0x8c8] sm:$0xff] %v743
        %1048 = vst [vmem:[%s145 + $0x8d0] sm:$0xff] %v744
        %1049 = vst [vmem:[%s145 + $0x8d8] sm:$0xff] %v745
        %1050 = vst [vmem:[%s145 + $0x8e0] sm:$0xff] %v746
        %1051 = vst [vmem:[%s145 + $0x8e8] sm:$0xff] %v747
        %1052 = vst [vmem:[%s145 + $0x8f0] sm:$0xff] %v748
        %1053 = vst [vmem:[%s145 + $0x8f8] sm:$0xff] %v749
        %1054 = vst [vmem:[%s145 + $0x900] sm:$0xff] %v750
        %1055 = vst [vmem:[%s145 + $0x908] sm:$0xff] %v751
        %1056 = vst [vmem:[%s145 + $0x910] sm:$0xff] %v752
        %1057 = vst [vmem:[%s145 + $0x918] sm:$0xff] %v753
        %1058 = vst [vmem:[%s145 + $0x920] sm:$0xff] %v754
        %1059 = vst [vmem:[%s145 + $0x928] sm:$0xff] %v755
        %1060 = vst [vmem:[%s145 + $0x930] sm:$0xff] %v756
        %1061 = vst [vmem:[%s145 + $0x938] sm:$0xff] %v757
        %1062 = vst [vmem:[%s145 + $0x940] sm:$0xff] %v758
        %1063 = vst [vmem:[%s145 + $0x948] sm:$0xff] %v759
        %1064 = vst [vmem:[%s145 + $0x950] sm:$0xff] %v760
        %1065 = vst [vmem:[%s145 + $0x958] sm:$0xff] %v761
        %1066 = vst [vmem:[%s145 + $0x960] sm:$0xff] %v762
        %1067 = vst [vmem:[%s145 + $0x968] sm:$0xff] %v763
        %1068 = vst [vmem:[%s145 + $0x970] sm:$0xff] %v764
        %1069 = vst [vmem:[%s145 + $0x978] sm:$0xff] %v765
        %s1070 = sand.u32 %s52, 1
        %s1071 = scalar_lea.sflag [#allocation4], %s1070
        %s1072 = sand.u32 %s52, 1
        %s1073 = smul.addr %s1072, 2432
        %s1074 = scalar_lea.vmem [#allocation5], %s1073
        // Predicated region
        $region29: #{tpu_custom_call.1} parent=23 // pred_check
          %p1075 = pneg %p62
        $region30: #{tpu_custom_call.1} parent=23 // pred_check_branch
          %1077 = sbr.rel (%p1075) target = $region32
        $region31: #{tpu_custom_call.1} parent=23 // pred_region
          %s1078 = smul.u32 38, %s18
          %s1079 = ssub.s32 75, %s1078
          %p1080 = scmp.lt.s32.totalorder %s1079, 38
          %s1081 = scalar_select %p1080, %s1079, 38
          %s1082 = smul.u32 8, %s1081
          %s1083 = smul.u32 %s1082, 8
          %s1084 = ssub.s32 2432, %s1083
          %s1085 = sshll.u32 %s1084, 4
          %1086 = vsyncadd %s1071, %s1085
          %p1087 = scmp.ne.s32.totalorder 0, %s1083
          %s1088 = smul.addr %s1078, 8
          %s1089 = smul.addr %s1088, 8
          %s1090 = scalar_lea.hbm %s1, %s1089
          %s1091 = smul.u32 64, %s1081
          %s1092 = sshll.u32 %s1074, 4
          %s1093 = int_to_ptr.vmem [resolvable:$true] %s1092
          %s1094 = sshll.u32 %s1090, 4
          %s1095 = int_to_ptr.hbm [resolvable:$true] %s1094
          %s1096 = sshll.u32 %s1091, 4
          %1100 = dma.vmem_to_hbm [thread:$0]  (%p1087), %s1093, %s1096, %s1095, %s1071, 1024, 1024, 64
        $region32: #{tpu_custom_call.1} parent=23 // pred_fallthru
          _
      $region24: #{tpu_custom_call.1} parent=5 // pred_fallthru
        _
      %p1101 = scmp.le.s32.totalorder 2, %s13
      // Predicated region
      $region33: #{tpu_custom_call.1} parent=5 // pred_check
        %p1102 = pneg %p1101
      $region34: #{tpu_custom_call.1} parent=5 // pred_check_branch
        %1104 = sbr.rel (%p1102) target = $region36
      $region35: #{tpu_custom_call.1} parent=5 // pred_region
        %s1105 = ssub.s32 %s13, 2
        // Predicated region
        $region37: #{tpu_custom_call.1} parent=35 // pred_check
          %p1106 = pneg %p68
        $region38: #{tpu_custom_call.1} parent=35 // pred_check_branch
          %1108 = sbr.rel (%p1106) target = $region40
        $region39: #{tpu_custom_call.1} parent=35 // pred_region
          %s1109 = sand.u32 %s53, 1
          %s1110 = scalar_lea.sflag [#allocation4], %s1109
          %s1111 = sand.u32 %s53, 1
          %s1112 = smul.addr %s1111, 2432
          %s1113 = scalar_lea.vmem [#allocation5], %s1112
          %1115 = dma.done %s1110, 38912
        $region40: #{tpu_custom_call.1} parent=35 // pred_fallthru
          _
      $region36: #{tpu_custom_call.1} parent=5 // pred_fallthru
        _
    $region6: #{tpu_custom_call.1} parent=1 // loop_footer
      %s17 = sadd.s32 1, %s13
    $region7: #{tpu_custom_call.1} parent=1 // loop_footer_branch
      %12 = sbr.rel target = $region3
    $region8: #{tpu_custom_call.1} parent=1 // loop_exit
      _
    %1116 = vsyncpa [#allocation3], 1
    %s1117 = scalar_lea.sflag [#allocation3], 1
    %1118 = vsyncpa %s1117, 1
    %1119 = vsyncpa [#allocation4], 1
    %s1120 = scalar_lea.sflag [#allocation4], 1
    %1121 = vsyncpa %s1120, 1

</llo_original>
